<compile_context>
chip_gen: v7x
topology: tpu7x:2x2x1
jax: 0.10.0
libtpu: 0.0.40
codegen_flags: <defaults>
</compile_context>

<pallas_src>
from functools import partial

import jax
import jax.numpy as jnp
import numpy as np
from jax.experimental import pallas as pl
from jax.experimental.pallas import tpu as pltpu


# ---------------------------------------------------------------------------
# Fused conv(3x3, as matmul) + BatchNorm(batch stats) + optional residual + ReLU
# ---------------------------------------------------------------------------
def _conv_bn_body(pT_ref, w_ref, g_ref, b_ref, res_ref, o_ref,
                  y_scr, sum_scr, sq_scr, *, eps, inv_m):
    ph = pl.program_id(0)   # 0: conv + stats, 1: normalize + write
    i = pl.program_id(1)    # M-tile index

    # ---- phase 0: lane-dense MXU matmul + per-channel stat accumulation ----
    @pl.when(ph == 0)
    def _compute():
        @pl.when(i == 0)
        def _init():
            sum_scr[...] = jnp.zeros_like(sum_scr)
            sq_scr[...] = jnp.zeros_like(sq_scr)

        # bf16 operands, f32 accumulation: (Cout, K) @ (K, TM) -> (Cout, TM).
        y = jnp.dot(w_ref[...], pT_ref[...], preferred_element_type=jnp.float32)
        y_scr[i] = y                                   # conv output stays in VMEM
        # Cross-lane reductions go to the XLU slot (free while MXU is busy).
        sum_scr[...] += jnp.sum(y, axis=1, keepdims=True)
        sq_scr[...] += jnp.sum(y * y, axis=1, keepdims=True)

    # ---- phase 1: BN normalize (+ residual) + ReLU, lane-dense store ----
    @pl.when(ph == 1)
    def _normalize():
        @pl.when(i == 0)
        def _finalize_stats():
            mean = sum_scr[...] * inv_m
            var = sq_scr[...] * inv_m - mean * mean            # biased variance
            scale = g_ref[...] * jax.lax.rsqrt(var + eps)      # EUP rsqrt
            sum_scr[...] = scale                               # reuse: now "scale"
            sq_scr[...] = b_ref[...] - mean * scale            # reuse: now "shift"

        z = y_scr[i] * sum_scr[...] + sq_scr[...]
        if res_ref is not None:
            z = z + res_ref[...].astype(jnp.float32)
        o_ref[...] = jnp.maximum(z, 0.0).astype(o_ref.dtype)


def _conv_bn_act_kernel(pT_ref, w_ref, g_ref, b_ref, o_ref,
                        y_scr, sum_scr, sq_scr, *, eps, inv_m):
    _conv_bn_body(pT_ref, w_ref, g_ref, b_ref, None, o_ref,
                  y_scr, sum_scr, sq_scr, eps=eps, inv_m=inv_m)


def _conv_bn_act_res_kernel(pT_ref, w_ref, g_ref, b_ref, res_ref, o_ref,
                            y_scr, sum_scr, sq_scr, *, eps, inv_m):
    _conv_bn_body(pT_ref, w_ref, g_ref, b_ref, res_ref, o_ref,
                  y_scr, sum_scr, sq_scr, eps=eps, inv_m=inv_m)


def _pick_tm(M, tm_req):
    """Largest 128-aligned tile <= tm_req that divides M (falls back to M)."""
    if M % 128 != 0:
        return M                      # tiny/irregular problem: single full block
    t = max(128, (min(tm_req, M) // 128) * 128)
    while M % t != 0:
        t -= 128
    return t


def conv3x3_bn_act(pT, w_flat, gamma, beta, *, residual=None, eps=1e-5, tm=512,
                   out_dtype=jnp.float32):
    """pT: (K, M) patch matrix (channel-major K, lane-major M).
    w_flat: (Cout, K) masked conv weight.  gamma/beta: (Cout,).
    residual: optional (Cout, M) tensor added before the final ReLU.
    Returns relu(BN(W @ pT) [+ residual]) with shape (Cout, M)."""
    K, M = pT.shape
    Cout = w_flat.shape[0]
    tm = _pick_tm(M, tm)
    n_m = M // tm

    pT_bf = pT.astype(jnp.bfloat16)          # bf16 MXU operands (f32 accumulate)
    w_bf = w_flat.astype(jnp.bfloat16)
    g2 = gamma.reshape(Cout, 1).astype(jnp.float32)
    b2 = beta.reshape(Cout, 1).astype(jnp.float32)

    in_specs = [
        # patches: streamed in phase 0; during phase 1 the index is held at the
        # LAST phase-0 block, so the phase transition triggers no extra DMA.
        pl.BlockSpec((K, tm), lambda ph, i, n=n_m: (0, i * (1 - ph) + (n - 1) * ph)),
        # resident masked weight / BN affine params
        pl.BlockSpec((Cout, K), lambda ph, i: (0, 0)),
        pl.BlockSpec((Cout, 1), lambda ph, i: (0, 0)),
        pl.BlockSpec((Cout, 1), lambda ph, i: (0, 0)),
    ]
    args = [pT_bf, w_bf, g2, b2]
    if residual is not None:
        # residual: only consumed in phase 1 (pinned to block 0 during phase 0,
        # which prefetches the first phase-1 tile early at zero extra cost).
        in_specs.append(pl.BlockSpec((Cout, tm), lambda ph, i: (0, i * ph)))
        args.append(residual.astype(jnp.float32))
        kern = partial(_conv_bn_act_res_kernel, eps=eps, inv_m=1.0 / M)
    else:
        kern = partial(_conv_bn_act_kernel, eps=eps, inv_m=1.0 / M)

    # VMEM budget: resident conv-output slab + double-buffered streaming tiles.
    # TODO(synk): for very large N*H*W the resident slab would need a tiled
    # two-pass BN instead (v7x has only 64 MiB VMEM).
    slab = Cout * M * 4
    bytes_in = K * tm * 2 + (Cout * tm * 4 if residual is not None else 0)
    bytes_out = Cout * tm * 4
    vmem_limit = int(min(64 << 20,
                         max(16 << 20, slab + 2 * (bytes_in + bytes_out) + (4 << 20))))

    return pl.pallas_call(
        kern,
        out_shape=jax.ShapeDtypeStruct((Cout, M), out_dtype),
        grid_spec=pltpu.PrefetchScalarGridSpec(
            num_scalar_prefetch=0,
            grid=(2, n_m),                 # phase-major: (compute+stats, normalize)
            in_specs=in_specs,
            # output is only written in phase 1; during phase 0 the index is
            # pinned to block 0 so no spurious HBM writebacks happen.
            out_specs=pl.BlockSpec((Cout, tm), lambda ph, i: (0, i * ph)),
            scratch_shapes=[
                pltpu.VMEM((n_m, Cout, tm), jnp.float32),  # conv output slab (no HBM round trip)
                pltpu.VMEM((Cout, 1), jnp.float32),        # per-channel sum   -> scale
                pltpu.VMEM((Cout, 1), jnp.float32),        # per-channel sumsq -> shift
            ],
        ),
        compiler_params=pltpu.CompilerParams(
            # BN stats are a cross-tile reduction held in scratch, so both grid
            # axes are sequential ("arbitrary").
            dimension_semantics=("arbitrary", "arbitrary"),
            vmem_limit_bytes=vmem_limit,
        ),
    )(*args)


# ---------------------------------------------------------------------------
# Wrapper glue: im2col in channel-major layout (only cheap leading-axis swaps)
# ---------------------------------------------------------------------------
def _im2col_3x3(x_cnhw, stride):
    """x_cnhw: (C, N, H, W).  Returns ((9*C, N*Ho*Wo) patch matrix, Ho, Wo)
    for a 3x3 conv with padding=1 and the given stride."""
    C, N, H, W = x_cnhw.shape
    Ho = (H + 2 - 3) // stride + 1
    Wo = (W + 2 - 3) // stride + 1
    xpad = jnp.pad(x_cnhw, ((0, 0), (0, 0), (1, 1), (1, 1)))
    cols = []
    for kh in range(3):
        for kw in range(3):
            cols.append(xpad[:, :,
                             kh:kh + stride * (Ho - 1) + 1:stride,
                             kw:kw + stride * (Wo - 1) + 1:stride])
    pT = jnp.stack(cols, axis=0).reshape(9 * C, N * Ho * Wo)
    return pT, Ho, Wo


def resnet_basicblock_forward(x, w_a, m_a, gamma_a, beta_a,
                              w_b, m_b, gamma_b, beta_b,
                              *, stride=1, eps=1e-5, tm=512):
    """ResNetBasicblock forward (training-mode BN, downsample=None).
    x: (N, Cin, H, W) f32 NCHW.  w_*: (planes, Cin_*, 3, 3), m_*: same shape,
    gamma_*/beta_*: (planes,).  Returns (N, planes, Ho, Wo) NCHW."""
    N, Cin, H, W = x.shape
    planes = w_a.shape[0]

    # GatedConv2d: effective weight = weight * mask, flattened to (Cout, 9*Cin)
    # in (kh, kw, c) order to match the patch matrix.
    wa_flat = jnp.transpose(w_a * m_a, (0, 2, 3, 1)).reshape(planes, 9 * Cin)
    wb_flat = jnp.transpose(w_b * m_b, (0, 2, 3, 1)).reshape(planes, 9 * planes)

    # Channel-major activation layout (C, N, H, W): one leading-axis swap.
    x_cm = jnp.transpose(x, (1, 0, 2, 3))
    pT_a, Ho, Wo = _im2col_3x3(x_cm, stride)

    # conv_a -> bn_a -> relu
    # TODO(synk): nn.Dropout(p=0.1) in train mode is stochastic; modeled as identity.
    h = conv3x3_bn_act(pT_a, wa_flat, gamma_a, beta_a, residual=None, eps=eps, tm=tm)

    # conv_b's im2col comes straight off the (C, M) kernel output: reshape only.
    pT_b, _, _ = _im2col_3x3(h.reshape(planes, N, Ho, Wo), 1)

    # Identity residual (module default downsample=None).
    if stride != 1 or Cin != planes:
        raise NotImplementedError("identity residual requires stride=1 and inplanes==planes")
    res_cm = x_cm.reshape(Cin, N * H * W)

    # conv_b -> bn_b -> +residual -> relu   (final dropout: identity, see TODO above)
    out_cm = conv3x3_bn_act(pT_b, wb_flat, gamma_b, beta_b, residual=res_cm, eps=eps, tm=tm)

    # (C, M) -> NCHW: leading-axis swap only.
    return jnp.transpose(out_cm.reshape(planes, N, Ho, Wo), (1, 0, 2, 3))


# ---------------------------------------------------------------------------
# Pure-JAX reference (bf16 conv operands / f32 accumulation, like the kernel)
# ---------------------------------------------------------------------------
def resnet_basicblock_ref(x, w_a, m_a, gamma_a, beta_a,
                          w_b, m_b, gamma_b, beta_b, *, stride=1, eps=1e-5):
    def conv(inp, w, s):
        return jax.lax.conv_general_dilated(
            inp.astype(jnp.bfloat16), w.astype(jnp.bfloat16),
            window_strides=(s, s), padding=((1, 1), (1, 1)),
            dimension_numbers=("NCHW", "OIHW", "NCHW"),
            preferred_element_type=jnp.float32)

    def bn(y, g, b):
        mean = jnp.mean(y, axis=(0, 2, 3), keepdims=True)
        var = jnp.mean((y - mean) ** 2, axis=(0, 2, 3), keepdims=True)  # biased
        return (y - mean) * jax.lax.rsqrt(var + eps) * g.reshape(1, -1, 1, 1) \
            + b.reshape(1, -1, 1, 1)

    h = jnp.maximum(bn(conv(x, w_a * m_a, stride), gamma_a, beta_a), 0.0)
    y = bn(conv(h, w_b * m_b, 1), gamma_b, beta_b)
    return jnp.maximum(x + y, 0.0)


# ---------------------------------------------------------------------------
if __name__ == "__main__":
    key = jax.random.PRNGKey(0)
    N, C, H, W = 2, 8, 16, 16          # inplanes == planes == 8, stride=1, downsample=None
    planes = C
    ks = jax.random.split(key, 7)

    x = jax.random.normal(ks[0], (N, C, H, W), dtype=jnp.float32)

    fan_in = C * 3 * 3
    bound = 1.0 / np.sqrt(fan_in)
    w_a = jax.random.uniform(ks[1], (planes, C, 3, 3), minval=-bound, maxval=bound,
                             dtype=jnp.float32)
    w_b = jax.random.uniform(ks[2], (planes, planes, 3, 3), minval=-bound, maxval=bound,
                             dtype=jnp.float32)
    m_a = jnp.ones_like(w_a)           # GatedConv2d masks (all ones at init)
    m_b = jnp.ones_like(w_b)
    gamma_a = 1.0 + 0.1 * jax.random.normal(ks[3], (planes,), dtype=jnp.float32)
    beta_a = 0.1 * jax.random.normal(ks[4], (planes,), dtype=jnp.float32)
    gamma_b = 1.0 + 0.1 * jax.random.normal(ks[5], (planes,), dtype=jnp.float32)
    beta_b = 0.1 * jax.random.normal(ks[6], (planes,), dtype=jnp.float32)

    out = resnet_basicblock_forward(x, w_a, m_a, gamma_a, beta_a,
                                    w_b, m_b, gamma_b, beta_b,
                                    stride=1, tm=256)   # tm=256 -> multi-tile grid
    out = jax.block_until_ready(out)

    ref = resnet_basicblock_ref(x, w_a, m_a, gamma_a, beta_a,
                                w_b, m_b, gamma_b, beta_b, stride=1)
    # bf16 MXU operands -> tolerances looser than a pure-f32 comparison.
    np.testing.assert_allclose(np.asarray(out), np.asarray(ref), atol=2e-2, rtol=2e-2)

    print("KERNEL_OK")
</pallas_src>

<mosaic_0001>
module attributes {stable_mosaic.version = 11 : i64} {
  func.func @_conv_bn_act_kernel(%arg0: i32, %arg1: i32, %arg2: memref<72x256xbf16, #tpu.memory_space<vmem>>, %arg3: memref<8x72xbf16, #tpu.memory_space<vmem>>, %arg4: memref<8x1xf32, #tpu.memory_space<vmem>>, %arg5: memref<8x1xf32, #tpu.memory_space<vmem>>, %arg6: memref<8x256xf32, #tpu.memory_space<vmem>>, %arg7: memref<2x8x256xf32, #tpu.memory_space<vmem>>, %arg8: memref<8x1xf32, #tpu.memory_space<vmem>>, %arg9: memref<8x1xf32, #tpu.memory_space<vmem>>) attributes {dimension_semantics = [#tpu.dimension_semantics<arbitrary>, #tpu.dimension_semantics<arbitrary>], iteration_bounds = array<i64: 2, 2>, scalar_prefetch = 0 : i64, scratch_operands = 3 : i64, tpu.core_type = #tpu.core_type<tc>, window_params = [{transform_indices = @transform_0, window_bounds = array<i64: 72, 256>}, {pipeline_mode = #tpu.pipeline_mode<synchronous>, transform_indices = @transform_1, window_bounds = array<i64: 8, 72>}, {pipeline_mode = #tpu.pipeline_mode<synchronous>, transform_indices = @transform_2, window_bounds = array<i64: 8, 1>}, {pipeline_mode = #tpu.pipeline_mode<synchronous>, transform_indices = @transform_3, window_bounds = array<i64: 8, 1>}, {transform_indices = @transform_4, window_bounds = array<i64: 8, 256>}]} {
    %c0_i32 = arith.constant 0 : i32
    %0 = arith.cmpi eq, %arg0, %c0_i32 : i32
    %1 = arith.extui %0 : i1 to i32
    %c0_i32_0 = arith.constant 0 : i32
    %2 = arith.cmpi ne, %1, %c0_i32_0 : i32
    scf.if %2 {
      %c0_i32_2 = arith.constant 0 : i32
      %6 = arith.cmpi eq, %arg1, %c0_i32_2 : i32
      %7 = arith.extui %6 : i1 to i32
      %c0_i32_3 = arith.constant 0 : i32
      %8 = arith.cmpi ne, %7, %c0_i32_3 : i32
      scf.if %8 {
        %cst_19 = arith.constant 0.000000e+00 : f32
        %27 = vector.broadcast %cst_19 : f32 to vector<8x1xf32>
        %c0_20 = arith.constant 0 : index
        %c0_21 = arith.constant 0 : index
        %28 = vector.load %arg8[%c0_20, %c0_21] : memref<8x1xf32, #tpu.memory_space<vmem>>, vector<8x1xf32>
        tpu.vector_store %arg8[%c0_20, %c0_21], %27 {strides = array<i32>} : memref<8x1xf32, #tpu.memory_space<vmem>>, vector<8x1xf32>,
        %cst_22 = arith.constant 0.000000e+00 : f32
        %29 = vector.broadcast %cst_22 : f32 to vector<8x1xf32>
        %c0_23 = arith.constant 0 : index
        %c0_24 = arith.constant 0 : index
        %30 = vector.load %arg9[%c0_23, %c0_24] : memref<8x1xf32, #tpu.memory_space<vmem>>, vector<8x1xf32>
        tpu.vector_store %arg9[%c0_23, %c0_24], %29 {strides = array<i32>} : memref<8x1xf32, #tpu.memory_space<vmem>>, vector<8x1xf32>,
      } else {
      }
      %c0 = arith.constant 0 : index
      %c0_4 = arith.constant 0 : index
      %9 = vector.load %arg3[%c0, %c0_4] : memref<8x72xbf16, #tpu.memory_space<vmem>>, vector<8x72xbf16>
      %c0_5 = arith.constant 0 : index
      %c0_6 = arith.constant 0 : index
      %10 = vector.load %arg2[%c0_5, %c0_6] : memref<72x256xbf16, #tpu.memory_space<vmem>>, vector<72x256xbf16>
      %cst = arith.constant dense<0.000000e+00> : vector<8x256xf32>
      %11 = tpu.matmul %9, %10, %cst {dimension_numbers = #tpu.dot_dimension_numbers<[1], [0], [0], [1], [0, 0, 1, 1], [], []>} : vector<8x72xbf16>, vector<72x256xbf16>, vector<8x256xf32> -> vector<8x256xf32>
      %12 = arith.index_cast %arg1 : i32 to index
      %c0_7 = arith.constant 0 : index
      %c0_8 = arith.constant 0 : index
      %13 = vector.load %arg7[%12, %c0_7, %c0_8] : memref<2x8x256xf32, #tpu.memory_space<vmem>>, vector<1x8x256xf32>
      %14 = vector.shape_cast %13 : vector<1x8x256xf32> to vector<8x256xf32>
      %15 = vector.shape_cast %11 : vector<8x256xf32> to vector<1x8x256xf32>
      tpu.vector_store %arg7[%12, %c0_7, %c0_8], %15 {strides = array<i32>} : memref<2x8x256xf32, #tpu.memory_space<vmem>>, vector<1x8x256xf32>,
      %c0_9 = arith.constant 0 : index
      %c0_10 = arith.constant 0 : index
      %16 = vector.load %arg8[%c0_9, %c0_10] : memref<8x1xf32, #tpu.memory_space<vmem>>, vector<8x1xf32>
      %cst_11 = arith.constant dense<0.000000e+00> : vector<8xf32>
      %17 = vector.multi_reduction <add>, %11, %cst_11 [1] : vector<8x256xf32> to vector<8xf32>
      %18 = vector.shape_cast %17 : vector<8xf32> to vector<8x1xf32>
      %19 = arith.addf %16, %18 : vector<8x1xf32>
      %c0_12 = arith.constant 0 : index
      %c0_13 = arith.constant 0 : index
      %20 = vector.load %arg8[%c0_12, %c0_13] : memref<8x1xf32, #tpu.memory_space<vmem>>, vector<8x1xf32>
      tpu.vector_store %arg8[%c0_12, %c0_13], %19 {strides = array<i32>} : memref<8x1xf32, #tpu.memory_space<vmem>>, vector<8x1xf32>,
      %c0_14 = arith.constant 0 : index
      %c0_15 = arith.constant 0 : index
      %21 = vector.load %arg9[%c0_14, %c0_15] : memref<8x1xf32, #tpu.memory_space<vmem>>, vector<8x1xf32>
      %22 = arith.mulf %11, %11 : vector<8x256xf32>
      %cst_16 = arith.constant dense<0.000000e+00> : vector<8xf32>
      %23 = vector.multi_reduction <add>, %22, %cst_16 [1] : vector<8x256xf32> to vector<8xf32>
      %24 = vector.shape_cast %23 : vector<8xf32> to vector<8x1xf32>
      %25 = arith.addf %21, %24 : vector<8x1xf32>
      %c0_17 = arith.constant 0 : index
      %c0_18 = arith.constant 0 : index
      %26 = vector.load %arg9[%c0_17, %c0_18] : memref<8x1xf32, #tpu.memory_space<vmem>>, vector<8x1xf32>
      tpu.vector_store %arg9[%c0_17, %c0_18], %25 {strides = array<i32>} : memref<8x1xf32, #tpu.memory_space<vmem>>, vector<8x1xf32>,
    } else {
    }
    %c1_i32 = arith.constant 1 : i32
    %3 = arith.cmpi eq, %arg0, %c1_i32 : i32
    %4 = arith.extui %3 : i1 to i32
    %c0_i32_1 = arith.constant 0 : i32
    %5 = arith.cmpi ne, %4, %c0_i32_1 : i32
    scf.if %5 {
      %c0_i32_2 = arith.constant 0 : i32
      %6 = arith.cmpi eq, %arg1, %c0_i32_2 : i32
      %7 = arith.extui %6 : i1 to i32
      %c0_i32_3 = arith.constant 0 : i32
      %8 = arith.cmpi ne, %7, %c0_i32_3 : i32
      scf.if %8 {
        %c0_11 = arith.constant 0 : index
        %c0_12 = arith.constant 0 : index
        %21 = vector.load %arg8[%c0_11, %c0_12] : memref<8x1xf32, #tpu.memory_space<vmem>>, vector<8x1xf32>
        %cst_13 = arith.constant 0.001953125 : f32
        %22 = vector.broadcast %cst_13 : f32 to vector<8x1xf32>
        %23 = arith.mulf %21, %22 : vector<8x1xf32>
        %c0_14 = arith.constant 0 : index
        %c0_15 = arith.constant 0 : index
        %24 = vector.load %arg9[%c0_14, %c0_15] : memref<8x1xf32, #tpu.memory_space<vmem>>, vector<8x1xf32>
        %cst_16 = arith.constant 0.001953125 : f32
        %25 = vector.broadcast %cst_16 : f32 to vector<8x1xf32>
        %26 = arith.mulf %24, %25 : vector<8x1xf32>
        %27 = arith.mulf %23, %23 : vector<8x1xf32>
        %28 = arith.subf %26, %27 : vector<8x1xf32>
        %c0_17 = arith.constant 0 : index
        %c0_18 = arith.constant 0 : index
        %29 = vector.load %arg4[%c0_17, %c0_18] : memref<8x1xf32, #tpu.memory_space<vmem>>, vector<8x1xf32>
        %cst_19 = arith.constant 9.99999974E-6 : f32
        %30 = vector.broadcast %cst_19 : f32 to vector<8x1xf32>
        %31 = arith.addf %28, %30 : vector<8x1xf32>
        %32 = math.rsqrt %31 : vector<8x1xf32>
        %33 = arith.mulf %29, %32 : vector<8x1xf32>
        %c0_20 = arith.constant 0 : index
        %c0_21 = arith.constant 0 : index
        %34 = vector.load %arg8[%c0_20, %c0_21] : memref<8x1xf32, #tpu.memory_space<vmem>>, vector<8x1xf32>
        tpu.vector_store %arg8[%c0_20, %c0_21], %33 {strides = array<i32>} : memref<8x1xf32, #tpu.memory_space<vmem>>, vector<8x1xf32>,
        %c0_22 = arith.constant 0 : index
        %c0_23 = arith.constant 0 : index
        %35 = vector.load %arg5[%c0_22, %c0_23] : memref<8x1xf32, #tpu.memory_space<vmem>>, vector<8x1xf32>
        %36 = arith.mulf %23, %33 : vector<8x1xf32>
        %37 = arith.subf %35, %36 : vector<8x1xf32>
        %c0_24 = arith.constant 0 : index
        %c0_25 = arith.constant 0 : index
        %38 = vector.load %arg9[%c0_24, %c0_25] : memref<8x1xf32, #tpu.memory_space<vmem>>, vector<8x1xf32>
        tpu.vector_store %arg9[%c0_24, %c0_25], %37 {strides = array<i32>} : memref<8x1xf32, #tpu.memory_space<vmem>>, vector<8x1xf32>,
      } else {
      }
      %9 = arith.index_cast %arg1 : i32 to index
      %c0 = arith.constant 0 : index
      %c0_4 = arith.constant 0 : index
      %10 = vector.load %arg7[%9, %c0, %c0_4] : memref<2x8x256xf32, #tpu.memory_space<vmem>>, vector<1x8x256xf32>
      %11 = vector.shape_cast %10 : vector<1x8x256xf32> to vector<8x256xf32>
      %c0_5 = arith.constant 0 : index
      %c0_6 = arith.constant 0 : index
      %12 = vector.load %arg8[%c0_5, %c0_6] : memref<8x1xf32, #tpu.memory_space<vmem>>, vector<8x1xf32>
      %13 = vector.broadcast %12 : vector<8x1xf32> to vector<8x256xf32>
      %14 = arith.mulf %11, %13 : vector<8x256xf32>
      %c0_7 = arith.constant 0 : index
      %c0_8 = arith.constant 0 : index
      %15 = vector.load %arg9[%c0_7, %c0_8] : memref<8x1xf32, #tpu.memory_space<vmem>>, vector<8x1xf32>
      %16 = vector.broadcast %15 : vector<8x1xf32> to vector<8x256xf32>
      %17 = arith.addf %14, %16 : vector<8x256xf32>
      %cst = arith.constant 0.000000e+00 : f32
      %18 = vector.broadcast %cst : f32 to vector<8x256xf32>
      %19 = arith.maximumf %17, %18 : vector<8x256xf32>
      %c0_9 = arith.constant 0 : index
      %c0_10 = arith.constant 0 : index
      %20 = vector.load %arg6[%c0_9, %c0_10] : memref<8x256xf32, #tpu.memory_space<vmem>>, vector<8x256xf32>
      tpu.vector_store %arg6[%c0_9, %c0_10], %19 {strides = array<i32>} : memref<8x256xf32, #tpu.memory_space<vmem>>, vector<8x256xf32>,
    } else {
    }
    return
  }
  func.func @transform_0(%arg0: i32, %arg1: i32) -> (i32, i32) {
    %c1_i32 = arith.constant 1 : i32
    %0 = arith.subi %c1_i32, %arg0 : i32
    %1 = arith.muli %arg1, %0 : i32
    %c1_i32_0 = arith.constant 1 : i32
    %2 = arith.muli %c1_i32_0, %arg0 : i32
    %3 = arith.addi %1, %2 : i32
    %c0_i32 = arith.constant 0 : i32
    %c0_i32_1 = arith.constant 0 : i32
    return %c0_i32, %3 : i32, i32
  }
  func.func @transform_1(%arg0: i32, %arg1: i32) -> (i32, i32) {
    %c0_i32 = arith.constant 0 : i32
    %c0_i32_0 = arith.constant 0 : i32
    %c0_i32_1 = arith.constant 0 : i32
    return %c0_i32, %c0_i32_0 : i32, i32
  }
  func.func @transform_2(%arg0: i32, %arg1: i32) -> (i32, i32) {
    %c0_i32 = arith.constant 0 : i32
    %c0_i32_0 = arith.constant 0 : i32
    %c0_i32_1 = arith.constant 0 : i32
    return %c0_i32, %c0_i32_0 : i32, i32
  }
  func.func @transform_3(%arg0: i32, %arg1: i32) -> (i32, i32) {
    %c0_i32 = arith.constant 0 : i32
    %c0_i32_0 = arith.constant 0 : i32
    %c0_i32_1 = arith.constant 0 : i32
    return %c0_i32, %c0_i32_0 : i32, i32
  }
  func.func @transform_4(%arg0: i32, %arg1: i32) -> (i32, i32) {
    %0 = arith.muli %arg1, %arg0 : i32
    %c0_i32 = arith.constant 0 : i32
    %c0_i32_0 = arith.constant 0 : i32
    return %c0_i32, %0 : i32, i32
  }
}

</mosaic_0001>

<llo_original>
// kernel: tpu_custom_call.1
$region0: #{tpu_custom_call.1}
  #allocation0 [shape = 'u32[]', space=smem, size = 0x4, offset = 0x4, fixed_abs, tag = 'smem constant byte address 0x4 - core index']
  #allocation1 [shape = 'u32[144,128]{1,0:T(1,128)}', space=vmem, size = 0x12000, scoped, tag = 'internal scratch']
  #allocation2 [shape = 'f32[2,8,256]{2,1,0:T(8,128)}', space=vmem, size = 0x4000, scoped, tag = 'scratch operand']
  #allocation3 [shape = 'f32[8,1]{1,0:T(8,128)}', space=vmem, size = 0x1000, scoped, tag = 'scratch operand']
  #allocation4 [shape = 'f32[8,1]{1,0:T(8,128)}', space=vmem, size = 0x1000, scoped, tag = 'scratch operand']
  %s0 = inlined_call_operand.hbm [shape: bf16[72,512], index: 0, kind: input, shape index: {}]
  %s1 = inlined_call_operand.vmem [shape: bf16[8,72], index: 1, kind: input, shape index: {}]
  %s2 = inlined_call_operand.vmem [shape: f32[8,1], index: 2, kind: input, shape index: {}]
  %s3 = inlined_call_operand.vmem [shape: f32[8,1], index: 3, kind: input, shape index: {}]
  %s4 = inlined_call_operand.hbm [shape: f32[8,512], index: 4, kind: output, shape index: {}]
  %s5 = sld [smem:[#allocation0]]
  $region69: #{tpu_custom_call.1} parent=0
    _
  %s7 = ssub.s32 1, %s5
  %s8 = scalar_select 0, %s7, %s5
  $region1: #{tpu_custom_call.1} parent=0
    #allocation5 [shape = 'u8[73728]{0}', space=vmem, size = 0x12000, scoped, tag = 'input window, operand 0']
    #allocation6 [shape = 's32[2]{0}', space=sflag, size = 0x8, scoped, tag = 'scoped memory for tpu_custom_call.1']
    #allocation7 [shape = 's32[2]{0}', space=sflag, size = 0x8, scoped, tag = 'scoped memory for tpu_custom_call.1']
    #allocation8 [shape = 'u8[16384]{0}', space=vmem, size = 0x4000, scoped, tag = 'output window, operand 0']
    %9 = vsyncpa [#allocation6], 0
    %s10 = scalar_lea.sflag [#allocation6], 1
    %11 = vsyncpa %s10, 0
    %12 = vsyncpa [#allocation7], 0
    %s13 = scalar_lea.sflag [#allocation7], 1
    %14 = vsyncpa %s13, 0
    loop: start=0, step=1, limit=6
    $region2: #{tpu_custom_call.1} parent=1 // loop_pre_header
      _
    $region3: #{tpu_custom_call.1} parent=1 // loop_header
      %s16 = sphi 0, %s20
      %p17 = scmp.ge.s32.totalorder %s16, 6
      %s23 = sphi 0, %s35
      %s24 = sphi 0, %s31
      %s25 = sphi 0, %s23
      %s26 = sphi 0, %s24
      %s27 = sphi 0, %s25
      %s28 = sphi 0, %s26
      %s44 = sphi 0, %s46
      %s47 = sphi 0, %s44
      %s48 = sphi 0, %s47
      %s64 = sphi 0, %s48
      %s68 = sphi 0, %s68
      %s70 = sphi 0, %s68
      %s71 = sphi 0, %s70
      %s85 = sphi 0, %s71
      %s89 = sphi 0, %s89
      %s91 = sphi 0, %s89
      %s92 = sphi 0, %s91
      %s106 = sphi 0, %s92
      %s110 = sphi 0, %s110
      %s112 = sphi 0, %s110
      %s113 = sphi 0, %s112
      %s127 = sphi 0, %s113
      %s135 = sphi 0, %s137
      %s138 = sphi 0, %s135
      %s139 = sphi 0, %s138
      %s155 = sphi 0, %s139
    $region4: #{tpu_custom_call.1} parent=1 // loop_header_branch
      %19 = sbr.rel (%p17) target = $region8
    $region5: #{tpu_custom_call.1} parent=1 // loop_body
      %s21 = ssub.s32 %s16, 1
      %s22 = ssub.s32 %s16, 2
      %s29 = sadd.s32 1, %s24
      %p30 = scmp.ge.s32.totalorder %s29, 2
      %s31 = scalar_select %p30, 0, %s29
      %s32 = sadd.s32 1, %s23
      %s33 = scalar_select %p30, %s32, %s23
      %p34 = scmp.ge.s32.totalorder %s33, 2
      %s35 = scalar_select %p34, 0, %s33
      %s36 = ssub.s32 1, %s23
      %s37 = smul.u32 %s24, %s36
      %s38 = sadd.s32 %s37, %s23
      %s39 = ssub.s32 1, %s35
      %s40 = smul.u32 %s31, %s39
      %s41 = sadd.s32 %s40, %s35
      %s42 = ssub.s32 %s38, %s41
      %p43 = scmp.eq.s32.totalorder %s42, 0
      %s45 = sadd.s32 %s44, 1
      %s46 = scalar_select %p43, %s44, %s45
      %p49 = pneg %p43
      %p50 = scmp.eq.s32.totalorder %s16, 3
      %p51 = por %p49, %p50
      %p52 = scmp.ne.s32.totalorder %s44, %s47
      %p53 = scmp.eq.s32.totalorder %s16, 0
      %p54 = por %p52, %p53
      %p55 = scmp.ne.s32.totalorder %s44, %s47
      %p56 = scmp.eq.s32.totalorder %s21, 3
      %p57 = por %p55, %p56
      %p58 = scmp.ne.s32.totalorder %s47, %s48
      %p59 = scmp.eq.s32.totalorder %s21, 0
      %p60 = por %p58, %p59
      %p61 = scmp.ne.s32.totalorder %s47, %s48
      %p62 = scmp.eq.s32.totalorder %s22, 3
      %p63 = por %p61, %p62
      %p65 = scmp.ne.s32.totalorder %s48, %s64
      %p66 = scmp.eq.s32.totalorder %s22, 0
      %p67 = por %p65, %p66
      %s69 = sadd.s32 %s68, 1
      %p72 = scmp.eq.s32.totalorder %s16, 3
      %p73 = scmp.ne.s32.totalorder %s68, %s70
      %p74 = scmp.eq.s32.totalorder %s16, 0
      %p75 = por %p73, %p74
      %p76 = scmp.ne.s32.totalorder %s68, %s70
      %p77 = scmp.eq.s32.totalorder %s21, 3
      %p78 = por %p76, %p77
      %p79 = scmp.ne.s32.totalorder %s70, %s71
      %p80 = scmp.eq.s32.totalorder %s21, 0
      %p81 = por %p79, %p80
      %p82 = scmp.ne.s32.totalorder %s70, %s71
      %p83 = scmp.eq.s32.totalorder %s22, 3
      %p84 = por %p82, %p83
      %p86 = scmp.ne.s32.totalorder %s71, %s85
      %p87 = scmp.eq.s32.totalorder %s22, 0
      %p88 = por %p86, %p87
      %s90 = sadd.s32 %s89, 1
      %p93 = scmp.eq.s32.totalorder %s16, 3
      %p94 = scmp.ne.s32.totalorder %s89, %s91
      %p95 = scmp.eq.s32.totalorder %s16, 0
      %p96 = por %p94, %p95
      %p97 = scmp.ne.s32.totalorder %s89, %s91
      %p98 = scmp.eq.s32.totalorder %s21, 3
      %p99 = por %p97, %p98
      %p100 = scmp.ne.s32.totalorder %s91, %s92
      %p101 = scmp.eq.s32.totalorder %s21, 0
      %p102 = por %p100, %p101
      %p103 = scmp.ne.s32.totalorder %s91, %s92
      %p104 = scmp.eq.s32.totalorder %s22, 3
      %p105 = por %p103, %p104
      %p107 = scmp.ne.s32.totalorder %s92, %s106
      %p108 = scmp.eq.s32.totalorder %s22, 0
      %p109 = por %p107, %p108
      %s111 = sadd.s32 %s110, 1
      %p114 = scmp.eq.s32.totalorder %s16, 3
      %p115 = scmp.ne.s32.totalorder %s110, %s112
      %p116 = scmp.eq.s32.totalorder %s16, 0
      %p117 = por %p115, %p116
      %p118 = scmp.ne.s32.totalorder %s110, %s112
      %p119 = scmp.eq.s32.totalorder %s21, 3
      %p120 = por %p118, %p119
      %p121 = scmp.ne.s32.totalorder %s112, %s113
      %p122 = scmp.eq.s32.totalorder %s21, 0
      %p123 = por %p121, %p122
      %p124 = scmp.ne.s32.totalorder %s112, %s113
      %p125 = scmp.eq.s32.totalorder %s22, 3
      %p126 = por %p124, %p125
      %p128 = scmp.ne.s32.totalorder %s113, %s127
      %p129 = scmp.eq.s32.totalorder %s22, 0
      %p130 = por %p128, %p129
      %s131 = smul.u32 %s24, %s23
      %s132 = smul.u32 %s31, %s35
      %s133 = ssub.s32 %s131, %s132
      %p134 = scmp.eq.s32.totalorder %s133, 0
      %s136 = sadd.s32 %s135, 1
      %s137 = scalar_select %p134, %s135, %s136
      %p140 = pneg %p134
      %p141 = scmp.eq.s32.totalorder %s16, 3
      %p142 = por %p140, %p141
      %p143 = scmp.ne.s32.totalorder %s135, %s138
      %p144 = scmp.eq.s32.totalorder %s16, 0
      %p145 = por %p143, %p144
      %p146 = scmp.ne.s32.totalorder %s135, %s138
      %p147 = scmp.eq.s32.totalorder %s21, 3
      %p148 = por %p146, %p147
      %p149 = scmp.ne.s32.totalorder %s138, %s139
      %p150 = scmp.eq.s32.totalorder %s21, 0
      %p151 = por %p149, %p150
      %p152 = scmp.ne.s32.totalorder %s138, %s139
      %p153 = scmp.eq.s32.totalorder %s22, 3
      %p154 = por %p152, %p153
      %p156 = scmp.ne.s32.totalorder %s139, %s155
      %p157 = scmp.eq.s32.totalorder %s22, 0
      %p158 = por %p156, %p157
      %p159 = scmp.le.s32.totalorder 1, %s16
      %p160 = scmp.lt.s32.totalorder %s16, 5
      %p161 = pnand %p159, %p160
      %p162 = pneg %p161
      // Predicated region
      $region9: #{tpu_custom_call.1} parent=5 // pred_check
        _
      $region10: #{tpu_custom_call.1} parent=5 // pred_check_branch
        %164 = sbr.rel (%p161) target = $region12
      $region11: #{tpu_custom_call.1} parent=5 // pred_region
        %s165 = ssub.s32 %s16, 1
        // Predicated region
        $region13: #{tpu_custom_call.1} parent=11 // pred_check
          %p166 = pneg %p81
        $region14: #{tpu_custom_call.1} parent=11 // pred_check_branch
          %168 = sbr.rel (%p166) target = $region16
        $region15: #{tpu_custom_call.1} parent=11 // pred_region
          _
        $region16: #{tpu_custom_call.1} parent=11 // pred_fallthru
          _
        // Predicated region
        $region17: #{tpu_custom_call.1} parent=11 // pred_check
          %p169 = pneg %p102
        $region18: #{tpu_custom_call.1} parent=11 // pred_check_branch
          %171 = sbr.rel (%p169) target = $region20
        $region19: #{tpu_custom_call.1} parent=11 // pred_region
          _
        $region20: #{tpu_custom_call.1} parent=11 // pred_fallthru
          _
        // Predicated region
        $region21: #{tpu_custom_call.1} parent=11 // pred_check
          %p172 = pneg %p123
        $region22: #{tpu_custom_call.1} parent=11 // pred_check_branch
          %174 = sbr.rel (%p172) target = $region24
        $region23: #{tpu_custom_call.1} parent=11 // pred_region
          _
        $region24: #{tpu_custom_call.1} parent=11 // pred_fallthru
          _
      $region12: #{tpu_custom_call.1} parent=5 // pred_fallthru
        _
      %p175 = scmp.lt.s32.totalorder %s16, 4
      // Predicated region
      $region25: #{tpu_custom_call.1} parent=5 // pred_check
        %p176 = pneg %p175
      $region26: #{tpu_custom_call.1} parent=5 // pred_check_branch
        %178 = sbr.rel (%p176) target = $region28
      $region27: #{tpu_custom_call.1} parent=5 // pred_region
        // Predicated region
        $region29: #{tpu_custom_call.1} parent=27 // pred_check
          %p179 = pneg %p54
        $region30: #{tpu_custom_call.1} parent=27 // pred_check_branch
          %181 = sbr.rel (%p179) target = $region32
        $region31: #{tpu_custom_call.1} parent=27 // pred_region
          %s182 = sand.u32 %s44, 1
          %s183 = scalar_lea.sflag [#allocation6], %s182
          %s184 = sand.u32 %s44, 1
          %s185 = smul.addr %s184, 72
          %s186 = scalar_lea.vmem [#allocation5], %s185
          %s187 = ssub.s32 1, %s23
          %s188 = smul.u32 %s24, %s187
          %s189 = sadd.s32 %s188, %s23
          %s190 = smul.u32 2, %s189
          %s192 = ssub.s32 1152, 1152
          %193 = vsyncadd %s183, %s192
          %s194 = smul.addr %s190, 64
          %s195 = scalar_lea.hbm %s0, %s194
          %s196 = sshll.u32 %s186, 4
          %s197 = int_to_ptr.vmem [resolvable:$true] %s196
          %202 = dma.hbm_to_vmem [thread:$0]  %s195, 1152, %s197, %s183, 256, 128, 8
        $region32: #{tpu_custom_call.1} parent=27 // pred_fallthru
          _
      $region28: #{tpu_custom_call.1} parent=5 // pred_fallthru
        _
      %p203 = scmp.le.s32.totalorder 1, %s16
      %p204 = scmp.lt.s32.totalorder %s16, 5
      %p205 = pnand %p203, %p204
      %p206 = pneg %p205
      // Predicated region
      $region33: #{tpu_custom_call.1} parent=5 // pred_check
        _
      $region34: #{tpu_custom_call.1} parent=5 // pred_check_branch
        %208 = sbr.rel (%p205) target = $region36
      $region35: #{tpu_custom_call.1} parent=5 // pred_region
        %s209 = ssub.s32 %s16, 1
        %s210 = sand.u32 %s47, 1
        %s211 = scalar_lea.sflag [#allocation6], %s210
        %s212 = sand.u32 %s47, 1
        %s213 = smul.addr %s212, 72
        %s214 = scalar_lea.vmem [#allocation5], %s213
        // Predicated region
        $region37: #{tpu_custom_call.1} parent=35 // pred_check
          %p215 = pneg %p60
        $region38: #{tpu_custom_call.1} parent=35 // pred_check_branch
          %217 = sbr.rel (%p215) target = $region40
        $region39: #{tpu_custom_call.1} parent=35 // pred_region
          %218 = dma.done %s211, 1152
        $region40: #{tpu_custom_call.1} parent=35 // pred_fallthru
          _
        %s219 = sand.u32 %s47, 1
        %s220 = scalar_lea.sflag [#allocation6], %s219
        %s221 = sand.u32 %s47, 1
        %s222 = smul.addr %s221, 72
        %s223 = scalar_lea.vmem [#allocation5], %s222
        %p224 = pneg %p60
        %p225 = pneg %p57
        %p226 = pneg %p81
        %p227 = pneg %p78
        %p228 = pneg %p102
        %p229 = pneg %p99
        %p230 = pneg %p123
        %p231 = pneg %p120
        %p232 = pneg %p151
        %p233 = pneg %p148
        %s234 = sand.u32 %s138, 1
        %s235 = scalar_lea.sflag [#allocation7], %s234
        %s236 = sand.u32 %s138, 1
        %s237 = smul.addr %s236, 16
        %s238 = scalar_lea.vmem [#allocation8], %s237
        %s239 = ssub.s32 1, %s25
        %s240 = smul.u32 %s26, %s239
        %s241 = sadd.s32 %s240, %s25
        %s242 = smul.u32 2, %s241
        %s243 = smul.u32 %s26, %s25
        %s244 = smul.u32 2, %s243
        %p246 = scmp.eq.s32.totalorder %s25, 0
        // Predicated region
        $region41: #{tpu_custom_call.1} parent=35 // pred_check
          %p247 = pneg %p246
        $region42: #{tpu_custom_call.1} parent=35 // pred_check_branch
          %249 = sbr.rel (%p247) target = $region44
        $region43: #{tpu_custom_call.1} parent=35 // pred_region
          %p250 = scmp.eq.s32.totalorder %s26, 0
          // Predicated region
          $region45: #{tpu_custom_call.1} parent=43 // pred_check
            %p251 = pneg %p250
          $region46: #{tpu_custom_call.1} parent=43 // pred_check_branch
            %253 = sbr.rel (%p251) target = $region48
          $region47: #{tpu_custom_call.1} parent=43 // pred_region
            %vm254 = vcmask 7168
            %255 = vst.msk [vmem:[#allocation3] sm:$0xff] %vm254, 0.0
            %256 = vst.msk [vmem:[#allocation4] sm:$0xff] %vm254, 0.0
          $region48: #{tpu_custom_call.1} parent=43 // pred_fallthru
            _
          %v257 = vld [vmem:[%s1] sm:$0xf]
          %v258 = vld [vmem:[%s214] sm:$0xff]
          %v259 = vld [vmem:[%s214 + $0x8] sm:$0xff]
          %v260 = vld [vmem:[%s214 + $0x10] sm:$0xff]
          %v261 = vld [vmem:[%s214 + $0x18] sm:$0xff]
          %v262 = vld [vmem:[%s214 + $0x20] sm:$0xff]
          %v263 = vld [vmem:[%s214 + $0x28] sm:$0xff]
          %v264 = vld [vmem:[%s214 + $0x30] sm:$0xff]
          %v265 = vld [vmem:[%s214 + $0x38] sm:$0xff]
          %v266 = vld [vmem:[%s214 + $0x40] sm:$0xff]
          %v276 = vunpack.c.l.b16 %v258
          %v277 = vunpack.c.h.b16 %v258
          %v278 = vunpack.c.l.b16 %v259
          %v279 = vunpack.c.h.b16 %v259
          %v280 = vunpack.c.l.b16 %v260
          %v281 = vunpack.c.h.b16 %v260
          %v282 = vunpack.c.l.b16 %v261
          %v283 = vunpack.c.h.b16 %v261
          %v284 = vunpack.c.l.b16 %v262
          %v285 = vunpack.c.h.b16 %v262
          %v286 = vunpack.c.l.b16 %v263
          %v287 = vunpack.c.h.b16 %v263
          %v288 = vunpack.c.l.b16 %v264
          %v289 = vunpack.c.h.b16 %v264
          %v290 = vunpack.c.l.b16 %v265
          %v291 = vunpack.c.h.b16 %v265
          %v292 = vunpack.c.l.b16 %v266
          %v293 = vunpack.c.h.b16 %v266
          %v294 = vpack.c.b16 %v278, %v276
          %v295 = vpack.c.b16 %v279, %v277
          %v296 = vpack.c.b16 %v282, %v280
          %v297 = vpack.c.b16 %v283, %v281
          %v298 = vpack.c.b16 %v286, %v284
          %v299 = vpack.c.b16 %v287, %v285
          %v300 = vpack.c.b16 %v290, %v288
          %v301 = vpack.c.b16 %v291, %v289
          %v302 = vpack.c.b16 %v292, %v292
          %v303 = vpack.c.b16 %v293, %v293
          %vm312 = vcmask 588800
          %v314 = vsel %vm312, %v257, 0
          %vm316 = vcmask 1043456
          %v318 = vsel %vm316, %v302, 0
          %v321 = vsel %vm316, %v303, 0
          %323 = vmatprep.subr.bf16.mxu0 %v295
          %324 = vmatpush1.bf16.msra.mxu0 %v294
          %325 = vmatprep.subr.bf16.mxu0 %v297
          %326 = vmatpush1.bf16.msra.mxu0 %v296
          %327 = vmatprep.subr.bf16.mxu0 %v299
          %328 = vmatpush1.bf16.msra.mxu0 %v298
          %329 = vmatprep.subr.bf16.mxu0 %v301
          %330 = vmatpush1.bf16.msra.mxu0 %v300
          %331 = vmatprep.subr.bf16.mxu0 %v321
          %332 = vmatpush1.bf16.msra.mxu0 %v318
          %333 = vmatprep.subr.bf16.mxu0 0
          %334 = vmatpush1.bf16.msra.mxu0 0
          %335 = vmatprep.subr.bf16.mxu0 0
          %336 = vmatpush1.bf16.msra.mxu0 0
          %337 = vmatprep.subr.bf16.mxu0 0
          %338 = vmatpush1.bf16.msra.mxu0 0
          %339 = vmatprep.subr.bf16.mxu0 0
          %340 = vmatpush1.bf16.msra.mxu0 0
          %341 = vmatprep.subr.bf16.mxu0 0
          %342 = vmatpush1.bf16.msra.mxu0 0
          %343 = vmatprep.subr.bf16.mxu0 0
          %344 = vmatpush1.bf16.msra.mxu0 0
          %345 = vmatprep.subr.bf16.mxu0 0
          %346 = vmatpush1.bf16.msra.mxu0 0
          %347 = vmatprep.subr.bf16.mxu0 0
          %348 = vmatpush1.bf16.msra.mxu0 0
          %349 = vmatprep.subr.bf16.mxu0 0
          %350 = vmatpush1.bf16.msra.mxu0 0
          %351 = vmatprep.subr.bf16.mxu0 0
          %352 = vmatpush1.bf16.msra.mxu0 0
          %353 = vmatprep.subr.bf16.mxu0 0
          %354 = vmatpush1.bf16.msra.mxu0 0
          %355 = vmatprep.mubr.bf16.mxu0 0
          %356 = vmatmul.mubr.bf16.gmra.mrb[0].mxu0 %v314
          %v357 = vpop.f32.mrb[0].mxu0
          %v358 = vadd.f32 0.0, %v357
          %v359 = vpop.f32.mrb[0].mxu0
          %v360 = vadd.f32 0.0, %v359
          %v361 = vpop.f32.mrb[0].mxu0
          %v362 = vpop.f32.mrb[0].mxu0
          %363 = vdwg.mxu0
          %s364 = smul.u32 %s26, 2
          %s365 = smul.addr %s364, 8
          %s366 = scalar_lea.vmem [#allocation2], %s365
          %367 = vst [vmem:[%s366] sm:$0xff] %v358
          %368 = vst [vmem:[%s366 + $0x8] sm:$0xff] %v360
          %v369 = vld [vmem:[#allocation3] sm:$0xff]
          %v370 = vadd.f32 %v358, %v360
          %371 = vadd.xlane.f32.xlu0 %v370
          %v372 = vpop.xlane.xlu0 %371
          %v373 = vadd.f32 %v369, %v372
          %vm374 = vcmask 7168
          %375 = vst.msk [vmem:[#allocation3] sm:$0xff] %vm374, %v373
          %v376 = vld [vmem:[#allocation4] sm:$0xff]
          %v377 = vmul.f32 %v358, %v358
          %v378 = vmul.f32 %v360, %v360
          %v379 = vadd.f32 %v377, %v378
          %380 = vadd.xlane.f32.xlu0 %v379
          %v381 = vpop.xlane.xlu0 %380
          %v382 = vadd.f32 %v376, %v381
          %383 = vst.msk [vmem:[#allocation4] sm:$0xff] %vm374, %v382
        $region44: #{tpu_custom_call.1} parent=35 // pred_fallthru
          _
        %p384 = scmp.eq.s32.totalorder %s25, 1
        // Predicated region
        $region49: #{tpu_custom_call.1} parent=35 // pred_check
          %p385 = pneg %p384
        $region50: #{tpu_custom_call.1} parent=35 // pred_check_branch
          %387 = sbr.rel (%p385) target = $region52
        $region51: #{tpu_custom_call.1} parent=35 // pred_region
          %p388 = scmp.eq.s32.totalorder %s26, 0
          // Predicated region
          $region53: #{tpu_custom_call.1} parent=51 // pred_check
            %p389 = pneg %p388
          $region54: #{tpu_custom_call.1} parent=51 // pred_check_branch
            %391 = sbr.rel (%p389) target = $region56
          $region55: #{tpu_custom_call.1} parent=51 // pred_region
            %v392 = vld [vmem:[#allocation3] sm:$0xff]
            %v393 = vmul.f32 %v392, 0.001953125
            %v394 = vld [vmem:[#allocation4] sm:$0xff]
            %v395 = vmul.f32 %v394, 0.001953125
            %v396 = vmul.f32 %v393, %v393
            %v397 = vsub.f32 %v395, %v396
            %v398 = vld [vmem:[%s2] sm:$0xff]
            %v399 = vadd.f32 %v397, 1e-05
            %v400 = vrsqrt.pop %v399
            %v401 = vmul.f32 %v398, %v400
            %vm402 = vcmask 7168
            %403 = vst.msk [vmem:[#allocation3] sm:$0xff] %vm402, %v401
            %v404 = vld [vmem:[%s3] sm:$0xff]
            %v405 = vmul.f32 %v393, %v401
            %v406 = vsub.f32 %v404, %v405
            %407 = vst.msk [vmem:[#allocation4] sm:$0xff] %vm402, %v406
          $region56: #{tpu_custom_call.1} parent=51 // pred_fallthru
            _
          %s408 = smul.u32 %s26, 2
          %s409 = smul.addr %s408, 8
          %s410 = scalar_lea.vmem [#allocation2], %s409
          %v411 = vld [vmem:[%s410] sm:$0xff]
          %v412 = vld [vmem:[%s410 + $0x8] sm:$0xff]
          %v413 = vld [vmem:[#allocation3] sm:$0xff]
          %415 = vset.pattern.permute.xlu0 0
          %416 = vperm.xlu0 %415, %v413
          %v417 = vpop.permute.xlu0 %416
          %v419 = vmul.f32 %v411, %v417
          %v420 = vmul.f32 %v412, %v417
          %v421 = vld [vmem:[#allocation4] sm:$0xff]
          %423 = vset.pattern.permute.xlu0 0
          %424 = vperm.xlu0 %423, %v421
          %v425 = vpop.permute.xlu0 %424
          %v427 = vadd.f32 %v419, %v425
          %v428 = vadd.f32 %v420, %v425
          %v429 = vmax.f32 %v427, 0.0
          %v430 = vmax.f32 %v428, 0.0
          %431 = vst [vmem:[%s238] sm:$0xff] %v429
          %432 = vst [vmem:[%s238 + $0x8] sm:$0xff] %v430
        $region52: #{tpu_custom_call.1} parent=35 // pred_fallthru
          _
        %s433 = sand.u32 %s138, 1
        %s434 = scalar_lea.sflag [#allocation7], %s433
        %s435 = sand.u32 %s138, 1
        %s436 = smul.addr %s435, 16
        %s437 = scalar_lea.vmem [#allocation8], %s436
        // Predicated region
        $region57: #{tpu_custom_call.1} parent=35 // pred_check
          %p438 = pneg %p148
        $region58: #{tpu_custom_call.1} parent=35 // pred_check_branch
          %440 = sbr.rel (%p438) target = $region60
        $region59: #{tpu_custom_call.1} parent=35 // pred_region
          %s441 = smul.u32 %s26, %s25
          %s442 = smul.u32 2, %s441
          %s444 = ssub.s32 256, 256
          %445 = vsyncadd %s434, %s444
          %s446 = smul.addr %s442, 128
          %s447 = scalar_lea.hbm %s4, %s446
          %s449 = sshll.u32 %s437, 4
          %s450 = int_to_ptr.vmem [resolvable:$true] %s449
          %452 = dma.vmem_to_hbm [thread:$0]  %s450, 256, %s447, %s434
        $region60: #{tpu_custom_call.1} parent=35 // pred_fallthru
          _
      $region36: #{tpu_custom_call.1} parent=5 // pred_fallthru
        _
      %p453 = scmp.le.s32.totalorder 2, %s16
      // Predicated region
      $region61: #{tpu_custom_call.1} parent=5 // pred_check
        %p454 = pneg %p453
      $region62: #{tpu_custom_call.1} parent=5 // pred_check_branch
        %456 = sbr.rel (%p454) target = $region64
      $region63: #{tpu_custom_call.1} parent=5 // pred_region
        %s457 = ssub.s32 %s16, 2
        // Predicated region
        $region65: #{tpu_custom_call.1} parent=63 // pred_check
          %p458 = pneg %p154
        $region66: #{tpu_custom_call.1} parent=63 // pred_check_branch
          %460 = sbr.rel (%p458) target = $region68
        $region67: #{tpu_custom_call.1} parent=63 // pred_region
          %s461 = sand.u32 %s139, 1
          %s462 = scalar_lea.sflag [#allocation7], %s461
          %s463 = sand.u32 %s139, 1
          %s464 = smul.addr %s463, 16
          %s465 = scalar_lea.vmem [#allocation8], %s464
          %466 = dma.done %s462, 256
        $region68: #{tpu_custom_call.1} parent=63 // pred_fallthru
          _
      $region64: #{tpu_custom_call.1} parent=5 // pred_fallthru
        _
    $region6: #{tpu_custom_call.1} parent=1 // loop_footer
      %s20 = sadd.s32 1, %s16
    $region7: #{tpu_custom_call.1} parent=1 // loop_footer_branch
      %15 = sbr.rel target = $region3
    $region8: #{tpu_custom_call.1} parent=1 // loop_exit
      _
    %467 = vsyncpa [#allocation6], 1
    %s468 = scalar_lea.sflag [#allocation6], 1
    %469 = vsyncpa %s468, 1
    %470 = vsyncpa [#allocation7], 1
    %s471 = scalar_lea.sflag [#allocation7], 1
    %472 = vsyncpa %s471, 1

</llo_original>
